<compile_context>
chip_gen: v7x
topology: tpu7x:2x2x1
jax: 0.10.0
libtpu: 0.0.40
codegen_flags: <defaults>
</compile_context>

<pallas_src>
import functools

import jax
import jax.numpy as jnp
from jax.experimental import pallas as pl
from jax.experimental.pallas import tpu as pltpu


def _time_shift_kernel(shifts_ref, x_ref, o_ref, *, pad):
    """One grid step == `bb` batch elements, full (C, T) waveform each.

    shifts_ref: SMEM int32[B]      (scalar prefetch)
    x_ref:      VMEM (bb, C, T)    input waveforms, time on lanes
    o_ref:      VMEM (bb, C, T)    shifted waveforms
    """
    bb, _, T = x_ref.shape
    b0 = pl.program_id(0) * bb

    # 1-D lane iota, hoisted out of the batch loop (JAX does not CSE iotas /
    # broadcasts, and the mask only varies along lanes).
    t_idx = jax.lax.broadcasted_iota(jnp.int32, (1, T), 1)

    for i in range(bb):  # static unroll over the small batch tile
        # Clamp: VMEM/vreg accesses have no runtime bounds check, so never let
        # a shift escape [-pad, pad].
        s = jnp.clip(shifts_ref[b0 + i], -pad, pad)

        # out[c, t] = x[c, (t + s) mod T] via a lane rotation on the XLU.
        # (np.roll semantics: rolled[t] = x[(t - amt) mod T]; amt = (-s) mod T.)
        rolled = pltpu.roll(x_ref[i], (T - s) % T, axis=1)

        # Zero the samples whose source index falls in the virtual zero-pad
        # region: valid iff 0 <= t + s < T.
        valid = jnp.logical_and(t_idx >= -s, t_idx < T - s)
        o_ref[i] = jnp.where(valid, rolled, 0).astype(o_ref.dtype)


def _pick_batch_block(B, bytes_per_batch, *, max_block=8, vmem_budget=4 << 20):
    """Largest divisor of B that is <= max_block and keeps a block <= budget."""
    cap = int(max(1, min(max_block, vmem_budget // max(1, bytes_per_batch))))
    bb = 1
    for d in range(1, cap + 1):
        if B % d == 0:
            bb = d
    return bb


def time_translate(waveforms, shifts, pad):
    """waveforms: (B, C, T) float; shifts: (B,) int in [-pad, pad]."""
    B, C, T = waveforms.shape
    shifts = shifts.astype(jnp.int32)
    bb = _pick_batch_block(B, C * T * waveforms.dtype.itemsize)

    # TODO(synk): for very long T, additionally tile the time axis with a
    # `pad`-sample halo; typical waveform rows fit comfortably in VMEM.
    return pl.pallas_call(
        functools.partial(_time_shift_kernel, pad=pad),
        out_shape=jax.ShapeDtypeStruct((B, C, T), waveforms.dtype),
        grid_spec=pltpu.PrefetchScalarGridSpec(
            num_scalar_prefetch=1,
            grid=(B // bb,),
            in_specs=[pl.BlockSpec((bb, C, T), lambda g, shifts_smem: (g, 0, 0))],
            out_specs=pl.BlockSpec((bb, C, T), lambda g, shifts_smem: (g, 0, 0)),
        ),
        compiler_params=pltpu.CompilerParams(
            dimension_semantics=("parallel",),
        ),
    )(shifts, waveforms)


def _reference(waveforms, shifts, pad):
    """Pure-JAX reference identical to the PyTorch forward."""
    B, C, T = waveforms.shape
    wp = jnp.pad(waveforms, ((0, 0), (0, 0), (pad, pad)))
    idx = jnp.arange(T)[None, None, :] + pad + shifts[:, None, None]
    idx = jnp.broadcast_to(idx, (B, C, T))
    return jnp.take_along_axis(wp, idx, axis=2)


if __name__ == "__main__":
    # Module hyper-parameters (deterministic, in-script).
    jitter = 0.25
    sample_rate = 64.0
    pad = int(jitter * sample_rate)          # = 16 samples of max shift

    # Small waveform-like shapes: (batch, channels, time), time lane-aligned.
    B, C, T = 2, 4, 256

    key = jax.random.PRNGKey(0)
    k_wave, k_shift = jax.random.split(key)
    waveforms = jax.random.normal(k_wave, (B, C, T), dtype=jnp.float32)

    # torch.rand -> uniform [0,1); scale to [-jitter, jitter); to samples;
    # truncate toward zero like .long().  (Shift sampling is host-side RNG,
    # matching the module's forward; the kernel consumes the integer shifts.)
    u = jax.random.uniform(k_shift, (B,), dtype=jnp.float32)
    shifts = ((2.0 * jitter * u - jitter) * sample_rate).astype(jnp.int32)

    out = jax.block_until_ready(time_translate(waveforms, shifts, pad))

    ref = _reference(waveforms, shifts, pad)
    assert out.shape == (B, C, T)
    assert jnp.allclose(out, ref), "Pallas kernel mismatch vs reference"

    print("KERNEL_OK")
</pallas_src>

<mosaic_0001>
module attributes {stable_mosaic.version = 11 : i64} {
  func.func @_time_shift_kernel(%arg0: i32, %arg1: memref<2xi32, #tpu.memory_space<smem>>, %arg2: memref<2x4x256xf32, #tpu.memory_space<vmem>>, %arg3: memref<2x4x256xf32, #tpu.memory_space<vmem>>) attributes {dimension_semantics = [#tpu.dimension_semantics<parallel>], iteration_bounds = array<i64: 1>, scalar_prefetch = 1 : i64, scratch_operands = 0 : i64, tpu.core_type = #tpu.core_type<tc>, window_params = [{transform_indices = @transform_0, window_bounds = array<i64: 2, 4, 256>}, {transform_indices = @transform_1, window_bounds = array<i64: 2, 4, 256>}]} {
    %c2_i32 = arith.constant 2 : i32
    %0 = arith.muli %arg0, %c2_i32 : i32
    %1 = tpu.iota {dimensions = array<i32: 1>} : vector<1x256xi32>
    %c0_i32 = arith.constant 0 : i32
    %2 = arith.addi %0, %c0_i32 : i32
    %3 = arith.index_cast %2 : i32 to index
    %4 = memref.load %arg1[%3] : memref<2xi32, #tpu.memory_space<smem>>
    %c-16_i32 = arith.constant -16 : i32
    %c16_i32 = arith.constant 16 : i32
    %5 = arith.maxsi %c-16_i32, %4 : i32
    %6 = arith.minsi %c16_i32, %5 : i32
    %c0 = arith.constant 0 : index
    %c0_0 = arith.constant 0 : index
    %c0_1 = arith.constant 0 : index
    %7 = vector.load %arg2[%c0, %c0_0, %c0_1] : memref<2x4x256xf32, #tpu.memory_space<vmem>>, vector<1x4x256xf32>
    %8 = vector.shape_cast %7 : vector<1x4x256xf32> to vector<4x256xf32>
    %c256_i32 = arith.constant 256 : i32
    %9 = arith.subi %c256_i32, %6 : i32
    %c256_i32_2 = arith.constant 256 : i32
    %c0_i32_3 = arith.constant 0 : i32
    %10 = arith.cmpi eq, %c256_i32_2, %c0_i32_3 : i32
    %c1_i32 = arith.constant 1 : i32
    %11 = arith.select %10, %c1_i32, %c256_i32_2 : i32
    %12 = arith.remsi %9, %11 : i32
    %c0_i32_4 = arith.constant 0 : i32
    %13 = arith.cmpi ne, %12, %c0_i32_4 : i32
    %c0_i32_5 = arith.constant 0 : i32
    %14 = arith.cmpi slt, %12, %c0_i32_5 : i32
    %c0_i32_6 = arith.constant 0 : i32
    %15 = arith.cmpi slt, %11, %c0_i32_6 : i32
    %16 = arith.xori %14, %15 : i1
    %17 = arith.andi %16, %13 : i1
    %18 = arith.addi %12, %11 : i32
    %19 = arith.select %17, %18, %12 : i32
    %20 = tpu.dynamic_rotate %8 by %19 dim 1 : vector<4x256xf32>, i32 -> vector<4x256xf32>
    %c0_i32_7 = arith.constant 0 : i32
    %21 = arith.subi %c0_i32_7, %6 : i32
    %22 = vector.broadcast %21 : i32 to vector<1x256xi32>
    %23 = arith.cmpi sge, %1, %22 : vector<1x256xi32>
    %c256_i32_8 = arith.constant 256 : i32
    %24 = arith.subi %c256_i32_8, %6 : i32
    %25 = vector.broadcast %24 : i32 to vector<1x256xi32>
    %26 = arith.cmpi slt, %1, %25 : vector<1x256xi32>
    %27 = arith.andi %23, %26 : vector<1x256xi1>
    %c0_i32_9 = arith.constant 0 : i32
    %28 = arith.sitofp %c0_i32_9 : i32 to f32
    %29 = vector.shape_cast %27 : vector<1x256xi1> to vector<1x256xi1>
    %30 = vector.broadcast %29 : vector<1x256xi1> to vector<4x256xi1>
    %31 = vector.broadcast %28 : f32 to vector<4x256xf32>
    %32 = arith.select %30, %20, %31 : vector<4x256xi1>, vector<4x256xf32>
    %c0_10 = arith.constant 0 : index
    %c0_11 = arith.constant 0 : index
    %c0_12 = arith.constant 0 : index
    %33 = vector.load %arg3[%c0_10, %c0_11, %c0_12] : memref<2x4x256xf32, #tpu.memory_space<vmem>>, vector<1x4x256xf32>
    %34 = vector.shape_cast %33 : vector<1x4x256xf32> to vector<4x256xf32>
    %35 = vector.shape_cast %32 : vector<4x256xf32> to vector<1x4x256xf32>
    tpu.vector_store %arg3[%c0_10, %c0_11, %c0_12], %35 {strides = array<i32>} : memref<2x4x256xf32, #tpu.memory_space<vmem>>, vector<1x4x256xf32>,
    %c1_i32_13 = arith.constant 1 : i32
    %36 = arith.addi %0, %c1_i32_13 : i32
    %37 = arith.index_cast %36 : i32 to index
    %38 = memref.load %arg1[%37] : memref<2xi32, #tpu.memory_space<smem>>
    %c-16_i32_14 = arith.constant -16 : i32
    %c16_i32_15 = arith.constant 16 : i32
    %39 = arith.maxsi %c-16_i32_14, %38 : i32
    %40 = arith.minsi %c16_i32_15, %39 : i32
    %c1 = arith.constant 1 : index
    %c0_16 = arith.constant 0 : index
    %c0_17 = arith.constant 0 : index
    %41 = vector.load %arg2[%c1, %c0_16, %c0_17] : memref<2x4x256xf32, #tpu.memory_space<vmem>>, vector<1x4x256xf32>
    %42 = vector.shape_cast %41 : vector<1x4x256xf32> to vector<4x256xf32>
    %c256_i32_18 = arith.constant 256 : i32
    %43 = arith.subi %c256_i32_18, %40 : i32
    %c256_i32_19 = arith.constant 256 : i32
    %c0_i32_20 = arith.constant 0 : i32
    %44 = arith.cmpi eq, %c256_i32_19, %c0_i32_20 : i32
    %c1_i32_21 = arith.constant 1 : i32
    %45 = arith.select %44, %c1_i32_21, %c256_i32_19 : i32
    %46 = arith.remsi %43, %45 : i32
    %c0_i32_22 = arith.constant 0 : i32
    %47 = arith.cmpi ne, %46, %c0_i32_22 : i32
    %c0_i32_23 = arith.constant 0 : i32
    %48 = arith.cmpi slt, %46, %c0_i32_23 : i32
    %c0_i32_24 = arith.constant 0 : i32
    %49 = arith.cmpi slt, %45, %c0_i32_24 : i32
    %50 = arith.xori %48, %49 : i1
    %51 = arith.andi %50, %47 : i1
    %52 = arith.addi %46, %45 : i32
    %53 = arith.select %51, %52, %46 : i32
    %54 = tpu.dynamic_rotate %42 by %53 dim 1 : vector<4x256xf32>, i32 -> vector<4x256xf32>
    %c0_i32_25 = arith.constant 0 : i32
    %55 = arith.subi %c0_i32_25, %40 : i32
    %56 = vector.broadcast %55 : i32 to vector<1x256xi32>
    %57 = arith.cmpi sge, %1, %56 : vector<1x256xi32>
    %c256_i32_26 = arith.constant 256 : i32
    %58 = arith.subi %c256_i32_26, %40 : i32
    %59 = vector.broadcast %58 : i32 to vector<1x256xi32>
    %60 = arith.cmpi slt, %1, %59 : vector<1x256xi32>
    %61 = arith.andi %57, %60 : vector<1x256xi1>
    %c0_i32_27 = arith.constant 0 : i32
    %62 = arith.sitofp %c0_i32_27 : i32 to f32
    %63 = vector.shape_cast %61 : vector<1x256xi1> to vector<1x256xi1>
    %64 = vector.broadcast %63 : vector<1x256xi1> to vector<4x256xi1>
    %65 = vector.broadcast %62 : f32 to vector<4x256xf32>
    %66 = arith.select %64, %54, %65 : vector<4x256xi1>, vector<4x256xf32>
    %c1_28 = arith.constant 1 : index
    %c0_29 = arith.constant 0 : index
    %c0_30 = arith.constant 0 : index
    %67 = vector.load %arg3[%c1_28, %c0_29, %c0_30] : memref<2x4x256xf32, #tpu.memory_space<vmem>>, vector<1x4x256xf32>
    %68 = vector.shape_cast %67 : vector<1x4x256xf32> to vector<4x256xf32>
    %69 = vector.shape_cast %66 : vector<4x256xf32> to vector<1x4x256xf32>
    tpu.vector_store %arg3[%c1_28, %c0_29, %c0_30], %69 {strides = array<i32>} : memref<2x4x256xf32, #tpu.memory_space<vmem>>, vector<1x4x256xf32>,
    return
  }
  func.func @transform_0(%arg0: i32, %arg1: memref<2xi32, #tpu.memory_space<smem>>) -> (i32, i32, i32) {
    %c0_i32 = arith.constant 0 : i32
    %c0_i32_0 = arith.constant 0 : i32
    %c0_i32_1 = arith.constant 0 : i32
    return %arg0, %c0_i32, %c0_i32_0 : i32, i32, i32
  }
  func.func @transform_1(%arg0: i32, %arg1: memref<2xi32, #tpu.memory_space<smem>>) -> (i32, i32, i32) {
    %c0_i32 = arith.constant 0 : i32
    %c0_i32_0 = arith.constant 0 : i32
    %c0_i32_1 = arith.constant 0 : i32
    return %arg0, %c0_i32, %c0_i32_0 : i32, i32, i32
  }
}

</mosaic_0001>

<llo_original>
// kernel: tpu_custom_call.1
$region0: #{tpu_custom_call.1}
  #allocation0 [shape = 'u32[]', space=smem, size = 0x4, offset = 0x4, fixed_abs, tag = 'smem constant byte address 0x4 - core index']
  #allocation1 [shape = 'u32[144,128]{1,0:T(1,128)}', space=vmem, size = 0x12000, scoped, tag = 'internal scratch']
  #allocation2 [shape = 's32[1]{0}', space=sflag, size = 0x4, scoped, tag = 'scoped memory for tpu_custom_call.1']
  #allocation3 [shape = 'u8[512]{0}', space=smem, size = 0x200, scoped, tag = 'prefetched SMEM operand 0']
  %s0 = inlined_call_operand.hbm [shape: s32[2], index: 0, kind: input, shape index: {}]
  %s1 = inlined_call_operand.hbm [shape: f32[2,4,256], index: 1, kind: input, shape index: {}]
  %s2 = inlined_call_operand.hbm [shape: f32[2,4,256], index: 2, kind: output, shape index: {}]
  %s3 = sld [smem:[#allocation0]]
  $region18: #{tpu_custom_call.1} parent=0
    _
  %s5 = ssub.s32 1, %s3
  %s6 = scalar_select 0, %s5, %s3
  %8 = dma.hbm_to_smem %s0, 16, [#allocation3], [#allocation2]
  %9 = dma.done [#allocation2], 16
  %10 = sfence
  $region1: #{tpu_custom_call.1} parent=0
    #allocation4 [shape = 'u8[8192]{0}', space=vmem, size = 0x2000, scoped, tag = 'input window, operand 1, single buffered']
    #allocation5 [shape = 's32[1]{0}', space=sflag, size = 0x4, scoped, tag = 'scoped memory for tpu_custom_call.1']
    #allocation6 [shape = 's32[1]{0}', space=sflag, size = 0x4, scoped, tag = 'scoped memory for tpu_custom_call.1']
    #allocation7 [shape = 'u8[8192]{0}', space=vmem, size = 0x2000, scoped, tag = 'output window, operand 0, single buffered']
    %11 = vsyncpa [#allocation5], 0
    %12 = vsyncpa [#allocation6], 0
    // Predicated region
    $region2: #{tpu_custom_call.1} parent=1 // pred_check
      _
    $region3: #{tpu_custom_call.1} parent=1 // pred_check_branch
      %14 = sbr.rel (0) target = $region5
    $region4: #{tpu_custom_call.1} parent=1 // pred_region
      %s16 = ssub.s32 256, 256
      %17 = vsyncadd [#allocation5], %s16
      %s18 = sshll.u32 [#allocation4], 4
      %s19 = int_to_ptr.vmem [resolvable:$true] %s18
      %24 = dma.hbm_to_vmem [thread:$0]  %s1, 256, %s19, [#allocation5], 128, 128, 8
    $region5: #{tpu_custom_call.1} parent=1 // pred_fallthru
      _
    // Predicated region
    $region6: #{tpu_custom_call.1} parent=1 // pred_check
      _
    $region7: #{tpu_custom_call.1} parent=1 // pred_check_branch
      %26 = sbr.rel (0) target = $region9
    $region8: #{tpu_custom_call.1} parent=1 // pred_region
      %27 = dma.done [#allocation5], 256
    $region9: #{tpu_custom_call.1} parent=1 // pred_fallthru
      _
    %s28 = smul.u32 0, 2
    %v29 = vlaneseq
    %v30 = vand.u32 %v29, 127
    %v31 = vadd.s32 %v30, 128
    %s32 = sld [smem:[#allocation3 + %s28]]
    %p33 = scmp.gt.s32.totalorder %s32, 4294967280
    %s34 = scalar_select %p33, %s32, 4294967280
    %p35 = scmp.lt.s32.totalorder %s34, 16
    %s36 = scalar_select %p35, %s34, 16
    %v37 = vld [vmem:[#allocation4] sm:$0xff]
    %s38 = ssub.s32 256, %s36
    %p39 = scmp.lt.s32.totalorder %s38, 0
    %s40 = ssub.s32 0, %s38
    %s41 = scalar_select %p39, %s40, %s38
    %s42 = sand.u32 %s41, 255
    %s43 = ssub.s32 0, %s42
    %s44 = scalar_select %p39, %s43, %s42
    %p45 = scmp.ne.s32.totalorder %s44, 0
    %p46 = scmp.lt.s32.totalorder %s44, 0
    %p47 = pnand %p46, %p45
    %p48 = pneg %p47
    %s49 = sadd.s32 %s44, 256
    %s50 = scalar_select %p48, %s49, %s44
    %v52 = vcombine.high %v37, %v37
    %s54 = sand.u32 %s50, 255
    %s55 = sand.u32 %s54, 127
    %s56 = sshrl.u32 %s54, 7
    %57 = vrot.lane.b32.xlu0 %v37, %s55
    %v58 = vpop.permute.xlu0 %57
    %59 = vrot.lane.b32.xlu0 %v52, %s55
    %v60 = vpop.permute.xlu0 %59
    %v61 = vstv %s55
    %vm62 = vcmp.lt.s32.totalorder %v30, %v61
    %v63 = vsel %vm62, %v58, %v60
    %v64 = vsel %vm62, %v60, %v58
    %s65 = sand.u32 %s56, 1
    %v66 = vstv %s65
    %vm67 = vcmp.ne.s32.totalorder %v66, 0
    %v68 = vsel %vm67, %v63, %v64
    %v69 = vsel %vm67, %v64, %v63
    %s70 = ssub.s32 0, %s36
    %v71 = vstv %s70
    %vm72 = vcmp.ge.s32.totalorder %v30, %v71
    %vm73 = vcmp.ge.s32.totalorder %v31, %v71
    %v74 = vstv %s38
    %vm75 = vcmp.lt.s32.totalorder %v30, %v74
    %vm76 = vcmp.lt.s32.totalorder %v31, %v74
    %vm77 = vmand %vm72, %vm75
    %vm78 = vmand %vm73, %vm76
    %v79 = vsel %vm77, 1, 0
    %v80 = vsel %vm78, 1, 0
    %vm81 = vcmp.eq.s32.totalorder %v79, 1
    %vm82 = vcmp.eq.s32.totalorder %v80, 1
    %v83 = vsel %vm81, %v68, 0.0
    %v84 = vsel %vm82, %v69, 0.0
    %v87 = vcombine.low %v83, %v84
    %89 = vst [vmem:[#allocation7] sm:$0xff] %v87
    %s90 = sadd.s32 %s28, 1
    %s91 = sld [smem:[#allocation3 + %s90]]
    %p92 = scmp.gt.s32.totalorder %s91, 4294967280
    %s93 = scalar_select %p92, %s91, 4294967280
    %p94 = scmp.lt.s32.totalorder %s93, 16
    %s95 = scalar_select %p94, %s93, 16
    %s96 = scalar_lea.vmem [#allocation4], 8
    %v97 = vld [vmem:[%s96] sm:$0xff]
    %s98 = ssub.s32 256, %s95
    %p99 = scmp.lt.s32.totalorder %s98, 0
    %s100 = ssub.s32 0, %s98
    %s101 = scalar_select %p99, %s100, %s98
    %s102 = sand.u32 %s101, 255
    %s103 = ssub.s32 0, %s102
    %s104 = scalar_select %p99, %s103, %s102
    %p105 = scmp.ne.s32.totalorder %s104, 0
    %p106 = scmp.lt.s32.totalorder %s104, 0
    %p107 = pnand %p106, %p105
    %p108 = pneg %p107
    %s109 = sadd.s32 %s104, 256
    %s110 = scalar_select %p108, %s109, %s104
    %v112 = vcombine.high %v97, %v97
    %s114 = sand.u32 %s110, 255
    %s115 = sand.u32 %s114, 127
    %s116 = sshrl.u32 %s114, 7
    %117 = vrot.lane.b32.xlu0 %v97, %s115
    %v118 = vpop.permute.xlu0 %117
    %119 = vrot.lane.b32.xlu0 %v112, %s115
    %v120 = vpop.permute.xlu0 %119
    %v121 = vstv %s115
    %vm122 = vcmp.lt.s32.totalorder %v30, %v121
    %v123 = vsel %vm122, %v118, %v120
    %v124 = vsel %vm122, %v120, %v118
    %s125 = sand.u32 %s116, 1
    %v126 = vstv %s125
    %vm127 = vcmp.ne.s32.totalorder %v126, 0
    %v128 = vsel %vm127, %v123, %v124
    %v129 = vsel %vm127, %v124, %v123
    %s130 = ssub.s32 0, %s95
    %v131 = vstv %s130
    %vm132 = vcmp.ge.s32.totalorder %v30, %v131
    %vm133 = vcmp.ge.s32.totalorder %v31, %v131
    %v134 = vstv %s98
    %vm135 = vcmp.lt.s32.totalorder %v30, %v134
    %vm136 = vcmp.lt.s32.totalorder %v31, %v134
    %vm137 = vmand %vm132, %vm135
    %vm138 = vmand %vm133, %vm136
    %v139 = vsel %vm137, 1, 0
    %v140 = vsel %vm138, 1, 0
    %vm141 = vcmp.eq.s32.totalorder %v139, 1
    %vm142 = vcmp.eq.s32.totalorder %v140, 1
    %v143 = vsel %vm141, %v128, 0.0
    %v144 = vsel %vm142, %v129, 0.0
    %v147 = vcombine.low %v143, %v144
    %s149 = scalar_lea.vmem [#allocation7], 8
    %150 = vst [vmem:[%s149] sm:$0xff] %v147
    // Predicated region
    $region10: #{tpu_custom_call.1} parent=1 // pred_check
      _
    $region11: #{tpu_custom_call.1} parent=1 // pred_check_branch
      %152 = sbr.rel (0) target = $region13
    $region12: #{tpu_custom_call.1} parent=1 // pred_region
      %s154 = ssub.s32 256, 256
      %155 = vsyncadd [#allocation6], %s154
      %s156 = sshll.u32 [#allocation7], 4
      %s157 = int_to_ptr.vmem [resolvable:$true] %s156
      %162 = dma.vmem_to_hbm [thread:$0]  %s157, 256, %s2, [#allocation6], 128, 128, 8
    $region13: #{tpu_custom_call.1} parent=1 // pred_fallthru
      _
    // Predicated region
    $region14: #{tpu_custom_call.1} parent=1 // pred_check
      _
    $region15: #{tpu_custom_call.1} parent=1 // pred_check_branch
      %164 = sbr.rel (0) target = $region17
    $region16: #{tpu_custom_call.1} parent=1 // pred_region
      %165 = dma.done [#allocation6], 256
    $region17: #{tpu_custom_call.1} parent=1 // pred_fallthru
      _
    %166 = vsyncpa [#allocation5], 1
    %167 = vsyncpa [#allocation6], 1

</llo_original>
